<compile_context>
chip_gen: v5e
topology: v5e:2x2
jax: 0.10.0
libtpu: 0.0.40
codegen_flags: <defaults>
</compile_context>

<pallas_src>
import jax
import jax.numpy as jnp
from jax import lax
from jax.experimental import pallas as pl
from jax.experimental.pallas import tpu as pltpu


# --------------------------------------------------------------------------------------
# entmax math
# --------------------------------------------------------------------------------------
def entmax_bisect_math(logits, alpha, n_iter, unroll=False):
    """entmax_bisect(x, alpha, dim=-1) — bisection algorithm from the entmax package.

    Used as the plain-JAX reference (n_iter=50, like the library default) and as the
    in-kernel fallback for generic alpha / expert counts (fully unrolled).
    NOTE: f_lo is intentionally NOT recomputed inside the loop — this matches the
    entmax package implementation and is correct for the monotone f.
    """
    X = logits.astype(jnp.float32) * (alpha - 1.0)
    d = X.shape[-1]
    inv_am1 = 1.0 / (alpha - 1.0)
    sq_case = abs(alpha - 1.5) < 1e-9  # static python branch: p = t*t, no exp/log on EUP

    def p_of(t):
        t = jnp.maximum(t, 0.0)
        if sq_case:
            return t * t
        pos = t > 0.0
        return jnp.where(pos, jnp.exp(inv_am1 * jnp.log(jnp.where(pos, t, 1.0))), 0.0)

    max_val = jnp.max(X, axis=-1, keepdims=True)
    tau_lo = max_val - 1.0                              # _gp(1, alpha) = 1
    tau_hi = max_val - (1.0 / d) ** (alpha - 1.0)       # _gp(1/d, alpha)
    f_lo = jnp.sum(p_of(X - tau_lo), axis=-1, keepdims=True) - 1.0
    dm = tau_hi - tau_lo

    if unroll:
        tau_m = tau_lo
        for _ in range(n_iter):                          # fully unrolled, short trip count
            dm = dm * 0.5
            tau_m = tau_lo + dm
            f_m = jnp.sum(p_of(X - tau_m), axis=-1, keepdims=True) - 1.0
            tau_lo = jnp.where(f_m * f_lo >= 0.0, tau_m, tau_lo)
    else:
        def body(_, carry):
            dm, t_lo, _ = carry
            dm = dm * 0.5
            tau_m = t_lo + dm
            f_m = jnp.sum(p_of(X - tau_m), axis=-1, keepdims=True) - 1.0
            t_lo = jnp.where((f_m * f_lo) >= 0.0, tau_m, t_lo)
            return (dm, t_lo, tau_m)

        _, _, tau_m = lax.fori_loop(0, n_iter, body, (dm, tau_lo, tau_lo))

    p = p_of(X - tau_m)
    return p / jnp.sum(p, axis=-1, keepdims=True)        # ensure_sum_one=True


def entmax15_exact_3(logits):
    """Exact (closed-form) entmax with alpha=1.5 for d=3 — replaces the serial bisection.

    3-element sort via compare/selects, then the sorted-threshold formula from
    Peters & Martins (entmax15): tau_k = mean_k - sqrt((1 - k*var_k)/k).
    Pure VPU column arithmetic + 2 sqrt — no serial loop, no lane reductions except
    the final 3-wide normalizing sum.
    """
    X = logits.astype(jnp.float32) * 0.5                  # X * (alpha - 1)
    x0, x1, x2 = X[:, 0:1], X[:, 1:2], X[:, 2:3]
    hi = jnp.maximum(jnp.maximum(x0, x1), x2)
    lo = jnp.minimum(jnp.minimum(x0, x1), x2)
    mid = x0 + x1 + x2 - hi - lo
    # shift by max for numerical stability (s1 = 0 >= s2 >= s3)
    s1 = hi - hi
    s2 = mid - hi
    s3 = lo - hi
    # k = 1
    tau1 = s1 - 1.0
    # k = 2
    mean2 = (s1 + s2) * 0.5
    msq2 = (s1 * s1 + s2 * s2) * 0.5
    ss2 = 2.0 * (msq2 - mean2 * mean2)
    tau2 = mean2 - jnp.sqrt(jnp.maximum((1.0 - ss2) * 0.5, 0.0))
    # k = 3
    mean3 = (s1 + s2 + s3) * (1.0 / 3.0)
    msq3 = (s1 * s1 + s2 * s2 + s3 * s3) * (1.0 / 3.0)
    ss3 = 3.0 * (msq3 - mean3 * mean3)
    tau3 = mean3 - jnp.sqrt(jnp.maximum((1.0 - ss3) * (1.0 / 3.0), 0.0))
    # support sizes are nested -> pick the largest valid k
    tau_star = jnp.where(tau3 <= s3, tau3, jnp.where(tau2 <= s2, tau2, tau1))
    t = jnp.maximum((X - hi) - tau_star, 0.0)
    p = t * t
    return p / jnp.sum(p, axis=-1, keepdims=True)          # exact, but normalize like ensure_sum_one


# --------------------------------------------------------------------------------------
# Fused Pallas kernel: merged (experts + gate) GIN chain + entmax + weighted_mean
# --------------------------------------------------------------------------------------
def make_fused_moe_kernel(*, num_layers, num_experts, num_classes, alpha, n_iter,
                          w_meta, b_meta, compute_dtype):
    E, C = num_experts, num_classes
    exact15 = (abs(alpha - 1.5) < 1e-9) and (E == 3)

    def kernel(x_ref, adj_ref, pool_ref, w_ref, b_ref, out_ref):
        def mm(a, b):
            # f32 accumulation always; operands already pre-cast HBM-side, so the only
            # real cast here (bf16 mode) is the unavoidable activation downcast.
            return jnp.dot(a.astype(compute_dtype), b.astype(compute_dtype),
                           preferred_element_type=jnp.float32)

        def w_at(i):                       # static slab slices: zero-cost carving
            off, r, c = w_meta[i]
            return w_ref[off:off + r, :c]

        def b_at(i):
            return b_ref[i:i + 1, :b_meta[i]]

        h = x_ref[...]                     # (B*N, F)   batch flattened into rows
        adj = adj_ref[...]                 # (B*N, B*N) block-diag adjacency with (1+eps)I folded in

        wi = bi = 0
        for _ in range(num_layers):
            aggm = mm(adj, h)                                          # GIN aggregation
            z = jnp.maximum(mm(aggm, w_at(wi)) + b_at(bi), 0.0); wi += 1; bi += 1
            z = jnp.maximum(mm(z, w_at(wi)) + b_at(bi), 0.0);    wi += 1; bi += 1
            h = z
        pooled = mm(pool_ref[...], h)                                  # global mean pooling
        logits = mm(pooled, w_at(wi)) + b_at(bi)                       # (B, E*C + E) packed heads

        expert_logits = logits[:, :E * C]                              # lane-packed expert logits
        gate_logits = logits[:, E * C:E * C + E]

        if exact15:
            gate_p = entmax15_exact_3(gate_logits)
        else:
            gate_p = entmax_bisect_math(gate_logits, alpha, n_iter, unroll=True)

        # weighted_mean aggregation: sum_e gate[b,e] * expert_out[e,b,c]
        agg = jnp.zeros((logits.shape[0], C), jnp.float32)
        for e in range(E):                                             # static, tiny
            agg = agg + expert_logits[:, e * C:(e + 1) * C] * gate_p[:, e:e + 1]

        # single combined output slab (one output buffer / one writeback DMA)
        out_ref[:, :E * C] = expert_logits
        out_ref[:, E * C:E * C + E] = gate_p
        out_ref[:, E * C + E:] = agg

    return kernel


# --------------------------------------------------------------------------------------
# Parameter init (deterministic) and slab packing
# --------------------------------------------------------------------------------------
def init_linear(key, din, dout):
    k1, k2 = jax.random.split(key)
    scale = 1.0 / jnp.sqrt(jnp.float32(din))
    w = jax.random.uniform(k1, (din, dout), jnp.float32, -scale, scale)
    b = jax.random.uniform(k2, (1, dout), jnp.float32, -scale, scale)
    return w, b


def init_gin(key, num_features, num_classes, hidden_dim, num_layers):
    params = {"layers": []}
    din = num_features
    for _ in range(num_layers):
        key, k1, k2 = jax.random.split(key, 3)
        w1, b1 = init_linear(k1, din, hidden_dim)
        w2, b2 = init_linear(k2, hidden_dim, hidden_dim)
        params["layers"].append((w1, b1, w2, b2))
        din = hidden_dim
    key, kh = jax.random.split(key)
    params["head"] = init_linear(kh, hidden_dim, num_classes)
    return params


def build_weight_slabs(gate_params, expert_params_list):
    """Merge gate + experts into one lane-packed GIN chain and pack everything into
    ONE weight slab (8-row-aligned static offsets) + ONE bias slab."""
    L = len(expert_params_list[0]["layers"])
    assert len(gate_params["layers"]) == L, "merged chain requires gate_depth == num_layers"
    chains = list(expert_params_list) + [gate_params]      # gate lanes packed last

    mats, biases = [], []
    for l in range(L):
        w1s, b1s, w2s, b2s = zip(*[p["layers"][l] for p in chains])
        if l == 0:
            w1p = jnp.concatenate(w1s, axis=1)             # shared input features -> concat outputs
        else:
            w1p = jax.scipy.linalg.block_diag(*w1s)        # chains stay independent
        mats += [w1p, jax.scipy.linalg.block_diag(*w2s)]
        biases += [jnp.concatenate(b1s, axis=1), jnp.concatenate(b2s, axis=1)]
    whs, bhs = zip(*[p["head"] for p in chains])
    mats.append(jax.scipy.linalg.block_diag(*whs))         # (W, E*C + E)
    biases.append(jnp.concatenate(bhs, axis=1))

    max_cols = max(int(m.shape[1]) for m in mats)
    padded, w_meta, rows = [], [], 0
    for m in mats:
        r, c = int(m.shape[0]), int(m.shape[1])
        r_pad = (-r) % 8                                    # keep every block sublane-aligned
        w_meta.append((rows, r, c))
        padded.append(jnp.pad(m, ((0, r_pad), (0, max_cols - c))))
        rows += r + r_pad
    w_slab = jnp.concatenate(padded, axis=0)                # (sum_rows, max_cols)

    b_meta = tuple(int(b.shape[1]) for b in biases)
    b_max = max(b_meta)
    b_slab = jnp.concatenate(
        [jnp.pad(b, ((0, 0), (0, b_max - b.shape[1]))) for b in biases], axis=0)
    return w_slab, b_slab, tuple(w_meta), b_meta


# --------------------------------------------------------------------------------------
# Single-pallas_call wrapper
# --------------------------------------------------------------------------------------
def moe_forward_fused(x, adj, gate_params, expert_params_list, *, entmax_alpha,
                      eps=0.0, n_iter=24, compute_dtype=jnp.float32):
    """Mirrors MoEModel.forward (augmentation disabled) + weighted_mean aggregate, fused."""
    B, N, Fdim = x.shape
    E = len(expert_params_list)
    C = int(expert_params_list[0]["head"][0].shape[1])
    num_layers = len(expert_params_list[0]["layers"])
    BN = B * N

    # batch flattened to rows; block-diag adjacency with (1+eps)*I folded in; mean-pool matrix.
    # (adjacency 0/1, identity, and 1/N pool entries are all exact in bf16 -> wrapper-side cast
    #  is lossless for these operands.)
    x2d = x.reshape(BN, Fdim).astype(compute_dtype)
    adj_hat = (jax.scipy.linalg.block_diag(*[adj[b] for b in range(B)])
               + (1.0 + eps) * jnp.eye(BN, dtype=jnp.float32)).astype(compute_dtype)
    pool = jnp.kron(jnp.eye(B, dtype=jnp.float32),
                    jnp.ones((1, N), jnp.float32) / N).astype(compute_dtype)

    w_slab, b_slab, w_meta, b_meta = build_weight_slabs(gate_params, expert_params_list)
    w_slab = w_slab.astype(compute_dtype)                  # biases stay f32 (post-accumulate add)

    out_cols = E * C + E + C
    kernel = make_fused_moe_kernel(
        num_layers=num_layers, num_experts=E, num_classes=C,
        alpha=entmax_alpha, n_iter=n_iter,
        w_meta=w_meta, b_meta=b_meta, compute_dtype=compute_dtype)

    # advisory cost estimate for XLA's scheduler
    W = w_meta[0][2]
    flops, din = 0, Fdim
    for _ in range(num_layers):
        flops += 2 * BN * BN * din + 2 * BN * din * W + 2 * BN * W * W
        din = W
    flops += 2 * B * BN * W + 2 * B * W * (E * C + E)
    bytes_accessed = int(sum(a.size * a.dtype.itemsize
                             for a in (x2d, adj_hat, pool, w_slab, b_slab))
                         + B * out_cols * 4)

    vmem_spec = pl.BlockSpec(memory_space=pltpu.MemorySpace.VMEM)
    out = pl.pallas_call(
        kernel,
        out_shape=jax.ShapeDtypeStruct((B, out_cols), jnp.float32),
        in_specs=[vmem_spec] * 5,
        out_specs=vmem_spec,
        compiler_params=pltpu.CompilerParams(vmem_limit_bytes=32 * 1024 * 1024),
        cost_estimate=pl.CostEstimate(flops=int(flops), transcendentals=4 * B,
                                      bytes_accessed=bytes_accessed),
    )(x2d, adj_hat, pool, w_slab, b_slab)

    expert_outputs = [out[:, e * C:(e + 1) * C] for e in range(E)]
    gate_weights = out[:, E * C:E * C + E]
    aggregated = out[:, E * C + E:]
    return expert_outputs, gate_weights, aggregated


# --------------------------------------------------------------------------------------
# Plain-JAX reference (validates the fused / lane-packed / merged-chain kernel)
# --------------------------------------------------------------------------------------
def reference_forward(x, adj, gate_params, expert_params_list, *, entmax_alpha,
                      eps=0.0, n_iter=50):
    def gin(params, x, adj):
        h = x
        for (w1, b1, w2, b2) in params["layers"]:
            aggm = (1.0 + eps) * h + jnp.einsum('bij,bjd->bid', adj, h)
            z = jnp.maximum(jnp.einsum('bnd,de->bne', aggm, w1) + b1, 0.0)
            z = jnp.maximum(jnp.einsum('bnd,de->bne', z, w2) + b2, 0.0)
            h = z
        wh, bh = params["head"]
        pooled = jnp.mean(h, axis=1)
        return pooled @ wh + bh

    gate_logits = gin(gate_params, x, adj)
    gate_w = entmax_bisect_math(gate_logits, entmax_alpha, n_iter)
    expert_outputs = [gin(p, x, adj) for p in expert_params_list]
    stacked = jnp.stack(expert_outputs, axis=0)                       # (E, B, C)
    aggregated = jnp.sum(stacked * gate_w.T[:, :, None], axis=0)      # weighted_mean
    return expert_outputs, gate_w, aggregated


# --------------------------------------------------------------------------------------
# Main
# --------------------------------------------------------------------------------------
if __name__ == "__main__":
    B, N, F = 2, 16, 8          # batch of graphs, nodes per graph, node features
    NUM_CLASSES = 4
    NUM_EXPERTS = 3
    HIDDEN = 32
    NUM_LAYERS = 2
    GATE_HIDDEN = 16
    GATE_DEPTH = 2
    ENTMAX_ALPHA = 1.5

    key = jax.random.PRNGKey(0)
    key, kx = jax.random.split(key)
    x = jax.random.normal(kx, (B, N, F), jnp.float32)

    # deterministic ring-graph adjacency (symmetric, no self loops), one per graph
    idx = jnp.arange(N)
    adj_single = (jnp.zeros((N, N), jnp.float32)
                  .at[idx, (idx + 1) % N].set(1.0)
                  .at[idx, (idx - 1) % N].set(1.0))
    adj = jnp.broadcast_to(adj_single, (B, N, N)) + jnp.zeros((B, N, N), jnp.float32)

    key, kg = jax.random.split(key)
    gate_params = init_gin(kg, F, NUM_EXPERTS, GATE_HIDDEN, GATE_DEPTH)
    expert_params = []
    for _ in range(NUM_EXPERTS):
        key, ke = jax.random.split(key)
        expert_params.append(init_gin(ke, F, NUM_CLASSES, HIDDEN, NUM_LAYERS))

    # ---- exact-fidelity (f32 operands) run + tight correctness check ----
    expert_outputs, gate_weights, aggregated = moe_forward_fused(
        x, adj, gate_params, expert_params, entmax_alpha=ENTMAX_ALPHA,
        compute_dtype=jnp.float32)

    jax.block_until_ready(gate_weights)
    jax.block_until_ready(aggregated)
    for o in expert_outputs:
        jax.block_until_ready(o)

    ref_eo, ref_gw, ref_agg = reference_forward(
        x, adj, gate_params, expert_params, entmax_alpha=ENTMAX_ALPHA)

    assert gate_weights.shape == (B, NUM_EXPERTS)
    assert aggregated.shape == (B, NUM_CLASSES)
    assert all(o.shape == (B, NUM_CLASSES) for o in expert_outputs)
    assert bool(jnp.all(jnp.isfinite(gate_weights)))
    assert bool(jnp.allclose(jnp.sum(gate_weights, axis=-1), 1.0, atol=1e-4))
    for o, r in zip(expert_outputs, ref_eo):
        assert bool(jnp.allclose(o, r, rtol=1e-3, atol=1e-3))
    assert bool(jnp.allclose(gate_weights, ref_gw, rtol=1e-3, atol=1e-3))
    assert bool(jnp.allclose(aggregated, ref_agg, rtol=1e-3, atol=1e-3))

    # ---- bf16-operand perf mode (MXU-native on v6e/v7x; lossless adj/pool cast) ----
    eo_bf, gw_bf, agg_bf = moe_forward_fused(
        x, adj, gate_params, expert_params, entmax_alpha=ENTMAX_ALPHA,
        compute_dtype=jnp.bfloat16)
    jax.block_until_ready(agg_bf)
    assert bool(jnp.all(jnp.isfinite(gw_bf))) and bool(jnp.all(jnp.isfinite(agg_bf)))
    assert bool(jnp.allclose(jnp.sum(gw_bf, axis=-1), 1.0, atol=1e-2))

    print("KERNEL_OK")
</pallas_src>

<mosaic_0001>
module attributes {stable_mosaic.version = 11 : i64} {
  func.func @kernel(%arg0: memref<32x8xf32, #tpu.memory_space<vmem>>, %arg1: memref<32x32xf32, #tpu.memory_space<vmem>>, %arg2: memref<2x32xf32, #tpu.memory_space<vmem>>, %arg3: memref<456x112xf32, #tpu.memory_space<vmem>>, %arg4: memref<5x112xf32, #tpu.memory_space<vmem>>, %arg5: memref<2x19xf32, #tpu.memory_space<vmem>>) attributes {dimension_semantics = [], scalar_prefetch = 0 : i64, scratch_operands = 0 : i64, tpu.core_type = #tpu.core_type<tc>} {
    %c0 = arith.constant 0 : index
    %c0_0 = arith.constant 0 : index
    %0 = vector.load %arg0[%c0, %c0_0] : memref<32x8xf32, #tpu.memory_space<vmem>>, vector<32x8xf32>
    %c0_1 = arith.constant 0 : index
    %c0_2 = arith.constant 0 : index
    %1 = vector.load %arg1[%c0_1, %c0_2] : memref<32x32xf32, #tpu.memory_space<vmem>>, vector<32x32xf32>
    %cst = arith.constant dense<0.000000e+00> : vector<32x8xf32>
    %2 = tpu.matmul %1, %0, %cst {dimension_numbers = #tpu.dot_dimension_numbers<[1], [0], [0], [1], [0, 0, 1, 1], [], []>} : vector<32x32xf32>, vector<32x8xf32>, vector<32x8xf32> -> vector<32x8xf32>
    %c0_3 = arith.constant 0 : index
    %c0_4 = arith.constant 0 : index
    %3 = vector.load %arg3[%c0_3, %c0_4] : memref<456x112xf32, #tpu.memory_space<vmem>>, vector<8x112xf32>
    %cst_5 = arith.constant dense<0.000000e+00> : vector<32x112xf32>
    %4 = tpu.matmul %2, %3, %cst_5 {dimension_numbers = #tpu.dot_dimension_numbers<[1], [0], [0], [1], [0, 0, 1, 1], [], []>} : vector<32x8xf32>, vector<8x112xf32>, vector<32x112xf32> -> vector<32x112xf32>
    %c0_6 = arith.constant 0 : index
    %c0_7 = arith.constant 0 : index
    %5 = vector.load %arg4[%c0_6, %c0_7] : memref<5x112xf32, #tpu.memory_space<vmem>>, vector<1x112xf32>
    %6 = vector.broadcast %5 : vector<1x112xf32> to vector<32x112xf32>
    %7 = arith.addf %4, %6 : vector<32x112xf32>
    %cst_8 = arith.constant 0.000000e+00 : f32
    %8 = vector.broadcast %cst_8 : f32 to vector<32x112xf32>
    %9 = arith.maximumf %7, %8 : vector<32x112xf32>
    %c8 = arith.constant 8 : index
    %c0_9 = arith.constant 0 : index
    %10 = vector.load %arg3[%c8, %c0_9] : memref<456x112xf32, #tpu.memory_space<vmem>>, vector<112x112xf32>
    %cst_10 = arith.constant dense<0.000000e+00> : vector<32x112xf32>
    %11 = tpu.matmul %9, %10, %cst_10 {dimension_numbers = #tpu.dot_dimension_numbers<[1], [0], [0], [1], [0, 0, 1, 1], [], []>} : vector<32x112xf32>, vector<112x112xf32>, vector<32x112xf32> -> vector<32x112xf32>
    %c1 = arith.constant 1 : index
    %c0_11 = arith.constant 0 : index
    %12 = vector.load %arg4[%c1, %c0_11] : memref<5x112xf32, #tpu.memory_space<vmem>>, vector<1x112xf32>
    %13 = vector.broadcast %12 : vector<1x112xf32> to vector<32x112xf32>
    %14 = arith.addf %11, %13 : vector<32x112xf32>
    %cst_12 = arith.constant 0.000000e+00 : f32
    %15 = vector.broadcast %cst_12 : f32 to vector<32x112xf32>
    %16 = arith.maximumf %14, %15 : vector<32x112xf32>
    %cst_13 = arith.constant dense<0.000000e+00> : vector<32x112xf32>
    %17 = tpu.matmul %1, %16, %cst_13 {dimension_numbers = #tpu.dot_dimension_numbers<[1], [0], [0], [1], [0, 0, 1, 1], [], []>} : vector<32x32xf32>, vector<32x112xf32>, vector<32x112xf32> -> vector<32x112xf32>
    %c120 = arith.constant 120 : index
    %c0_14 = arith.constant 0 : index
    %18 = vector.load %arg3[%c120, %c0_14] : memref<456x112xf32, #tpu.memory_space<vmem>>, vector<112x112xf32>
    %cst_15 = arith.constant dense<0.000000e+00> : vector<32x112xf32>
    %19 = tpu.matmul %17, %18, %cst_15 {dimension_numbers = #tpu.dot_dimension_numbers<[1], [0], [0], [1], [0, 0, 1, 1], [], []>} : vector<32x112xf32>, vector<112x112xf32>, vector<32x112xf32> -> vector<32x112xf32>
    %c2 = arith.constant 2 : index
    %c0_16 = arith.constant 0 : index
    %20 = vector.load %arg4[%c2, %c0_16] : memref<5x112xf32, #tpu.memory_space<vmem>>, vector<1x112xf32>
    %21 = vector.broadcast %20 : vector<1x112xf32> to vector<32x112xf32>
    %22 = arith.addf %19, %21 : vector<32x112xf32>
    %cst_17 = arith.constant 0.000000e+00 : f32
    %23 = vector.broadcast %cst_17 : f32 to vector<32x112xf32>
    %24 = arith.maximumf %22, %23 : vector<32x112xf32>
    %c232 = arith.constant 232 : index
    %c0_18 = arith.constant 0 : index
    %25 = vector.load %arg3[%c232, %c0_18] : memref<456x112xf32, #tpu.memory_space<vmem>>, vector<112x112xf32>
    %cst_19 = arith.constant dense<0.000000e+00> : vector<32x112xf32>
    %26 = tpu.matmul %24, %25, %cst_19 {dimension_numbers = #tpu.dot_dimension_numbers<[1], [0], [0], [1], [0, 0, 1, 1], [], []>} : vector<32x112xf32>, vector<112x112xf32>, vector<32x112xf32> -> vector<32x112xf32>
    %c3 = arith.constant 3 : index
    %c0_20 = arith.constant 0 : index
    %27 = vector.load %arg4[%c3, %c0_20] : memref<5x112xf32, #tpu.memory_space<vmem>>, vector<1x112xf32>
    %28 = vector.broadcast %27 : vector<1x112xf32> to vector<32x112xf32>
    %29 = arith.addf %26, %28 : vector<32x112xf32>
    %cst_21 = arith.constant 0.000000e+00 : f32
    %30 = vector.broadcast %cst_21 : f32 to vector<32x112xf32>
    %31 = arith.maximumf %29, %30 : vector<32x112xf32>
    %c0_22 = arith.constant 0 : index
    %c0_23 = arith.constant 0 : index
    %32 = vector.load %arg2[%c0_22, %c0_23] : memref<2x32xf32, #tpu.memory_space<vmem>>, vector<2x32xf32>
    %cst_24 = arith.constant dense<0.000000e+00> : vector<2x112xf32>
    %33 = tpu.matmul %32, %31, %cst_24 {dimension_numbers = #tpu.dot_dimension_numbers<[1], [0], [0], [1], [0, 0, 1, 1], [], []>} : vector<2x32xf32>, vector<32x112xf32>, vector<2x112xf32> -> vector<2x112xf32>
    %c344 = arith.constant 344 : index
    %c0_25 = arith.constant 0 : index
    %34 = vector.load %arg3[%c344, %c0_25] : memref<456x112xf32, #tpu.memory_space<vmem>>, vector<112x15xf32>
    %cst_26 = arith.constant dense<0.000000e+00> : vector<2x15xf32>
    %35 = tpu.matmul %33, %34, %cst_26 {dimension_numbers = #tpu.dot_dimension_numbers<[1], [0], [0], [1], [0, 0, 1, 1], [], []>} : vector<2x112xf32>, vector<112x15xf32>, vector<2x15xf32> -> vector<2x15xf32>
    %c4 = arith.constant 4 : index
    %c0_27 = arith.constant 0 : index
    %36 = vector.load %arg4[%c4, %c0_27] : memref<5x112xf32, #tpu.memory_space<vmem>>, vector<1x15xf32>
    %37 = vector.broadcast %36 : vector<1x15xf32> to vector<2x15xf32>
    %38 = arith.addf %35, %37 : vector<2x15xf32>
    %39 = vector.extract_strided_slice %38 {offsets = [0, 0], sizes = [2, 12], strides = [1, 1]} : vector<2x15xf32> to vector<2x12xf32>
    %40 = vector.extract_strided_slice %38 {offsets = [0, 12], sizes = [2, 3], strides = [1, 1]} : vector<2x15xf32> to vector<2x3xf32>
    %cst_28 = arith.constant 5.000000e-01 : f32
    %41 = vector.broadcast %cst_28 : f32 to vector<2x3xf32>
    %42 = arith.mulf %40, %41 : vector<2x3xf32>
    %43 = vector.extract_strided_slice %42 {offsets = [0, 0], sizes = [2, 1], strides = [1, 1]} : vector<2x3xf32> to vector<2x1xf32>
    %44 = vector.extract_strided_slice %42 {offsets = [0, 1], sizes = [2, 1], strides = [1, 1]} : vector<2x3xf32> to vector<2x1xf32>
    %45 = vector.extract_strided_slice %42 {offsets = [0, 2], sizes = [2, 1], strides = [1, 1]} : vector<2x3xf32> to vector<2x1xf32>
    %46 = arith.maximumf %43, %44 : vector<2x1xf32>
    %47 = arith.maximumf %46, %45 : vector<2x1xf32>
    %48 = arith.minimumf %43, %44 : vector<2x1xf32>
    %49 = arith.minimumf %48, %45 : vector<2x1xf32>
    %50 = arith.addf %43, %44 : vector<2x1xf32>
    %51 = arith.addf %50, %45 : vector<2x1xf32>
    %52 = arith.subf %51, %47 : vector<2x1xf32>
    %53 = arith.subf %52, %49 : vector<2x1xf32>
    %54 = arith.subf %47, %47 : vector<2x1xf32>
    %55 = arith.subf %53, %47 : vector<2x1xf32>
    %56 = arith.subf %49, %47 : vector<2x1xf32>
    %cst_29 = arith.constant 1.000000e+00 : f32
    %57 = vector.broadcast %cst_29 : f32 to vector<2x1xf32>
    %58 = arith.subf %54, %57 : vector<2x1xf32>
    %59 = arith.addf %54, %55 : vector<2x1xf32>
    %cst_30 = arith.constant 5.000000e-01 : f32
    %60 = vector.broadcast %cst_30 : f32 to vector<2x1xf32>
    %61 = arith.mulf %59, %60 : vector<2x1xf32>
    %62 = arith.mulf %54, %54 : vector<2x1xf32>
    %63 = arith.mulf %55, %55 : vector<2x1xf32>
    %64 = arith.addf %62, %63 : vector<2x1xf32>
    %cst_31 = arith.constant 5.000000e-01 : f32
    %65 = vector.broadcast %cst_31 : f32 to vector<2x1xf32>
    %66 = arith.mulf %64, %65 : vector<2x1xf32>
    %67 = arith.mulf %61, %61 : vector<2x1xf32>
    %68 = arith.subf %66, %67 : vector<2x1xf32>
    %cst_32 = arith.constant 2.000000e+00 : f32
    %69 = vector.broadcast %cst_32 : f32 to vector<2x1xf32>
    %70 = arith.mulf %69, %68 : vector<2x1xf32>
    %cst_33 = arith.constant 1.000000e+00 : f32
    %71 = vector.broadcast %cst_33 : f32 to vector<2x1xf32>
    %72 = arith.subf %71, %70 : vector<2x1xf32>
    %cst_34 = arith.constant 5.000000e-01 : f32
    %73 = vector.broadcast %cst_34 : f32 to vector<2x1xf32>
    %74 = arith.mulf %72, %73 : vector<2x1xf32>
    %cst_35 = arith.constant 0.000000e+00 : f32
    %75 = vector.broadcast %cst_35 : f32 to vector<2x1xf32>
    %76 = arith.maximumf %74, %75 : vector<2x1xf32>
    %77 = math.sqrt %76 : vector<2x1xf32>
    %78 = arith.subf %61, %77 : vector<2x1xf32>
    %79 = arith.addf %54, %55 : vector<2x1xf32>
    %80 = arith.addf %79, %56 : vector<2x1xf32>
    %cst_36 = arith.constant 0.333333343 : f32
    %81 = vector.broadcast %cst_36 : f32 to vector<2x1xf32>
    %82 = arith.mulf %80, %81 : vector<2x1xf32>
    %83 = arith.mulf %54, %54 : vector<2x1xf32>
    %84 = arith.mulf %55, %55 : vector<2x1xf32>
    %85 = arith.addf %83, %84 : vector<2x1xf32>
    %86 = arith.mulf %56, %56 : vector<2x1xf32>
    %87 = arith.addf %85, %86 : vector<2x1xf32>
    %cst_37 = arith.constant 0.333333343 : f32
    %88 = vector.broadcast %cst_37 : f32 to vector<2x1xf32>
    %89 = arith.mulf %87, %88 : vector<2x1xf32>
    %90 = arith.mulf %82, %82 : vector<2x1xf32>
    %91 = arith.subf %89, %90 : vector<2x1xf32>
    %cst_38 = arith.constant 3.000000e+00 : f32
    %92 = vector.broadcast %cst_38 : f32 to vector<2x1xf32>
    %93 = arith.mulf %92, %91 : vector<2x1xf32>
    %cst_39 = arith.constant 1.000000e+00 : f32
    %94 = vector.broadcast %cst_39 : f32 to vector<2x1xf32>
    %95 = arith.subf %94, %93 : vector<2x1xf32>
    %cst_40 = arith.constant 0.333333343 : f32
    %96 = vector.broadcast %cst_40 : f32 to vector<2x1xf32>
    %97 = arith.mulf %95, %96 : vector<2x1xf32>
    %cst_41 = arith.constant 0.000000e+00 : f32
    %98 = vector.broadcast %cst_41 : f32 to vector<2x1xf32>
    %99 = arith.maximumf %97, %98 : vector<2x1xf32>
    %100 = math.sqrt %99 : vector<2x1xf32>
    %101 = arith.subf %82, %100 : vector<2x1xf32>
    %102 = arith.cmpf ole, %101, %56 : vector<2x1xf32>
    %103 = arith.cmpf ole, %78, %55 : vector<2x1xf32>
    %104 = arith.select %103, %78, %58 : vector<2x1xi1>, vector<2x1xf32>
    %105 = arith.select %102, %101, %104 : vector<2x1xi1>, vector<2x1xf32>
    %106 = vector.broadcast %47 : vector<2x1xf32> to vector<2x3xf32>
    %107 = arith.subf %42, %106 : vector<2x3xf32>
    %108 = vector.broadcast %105 : vector<2x1xf32> to vector<2x3xf32>
    %109 = arith.subf %107, %108 : vector<2x3xf32>
    %cst_42 = arith.constant 0.000000e+00 : f32
    %110 = vector.broadcast %cst_42 : f32 to vector<2x3xf32>
    %111 = arith.maximumf %109, %110 : vector<2x3xf32>
    %112 = arith.mulf %111, %111 : vector<2x3xf32>
    %cst_43 = arith.constant dense<0.000000e+00> : vector<2xf32>
    %113 = vector.multi_reduction <add>, %112, %cst_43 [1] : vector<2x3xf32> to vector<2xf32>
    %114 = vector.shape_cast %113 : vector<2xf32> to vector<2x1xf32>
    %115 = vector.broadcast %114 : vector<2x1xf32> to vector<2x3xf32>
    %116 = arith.divf %112, %115 : vector<2x3xf32>
    %cst_44 = arith.constant 0.000000e+00 : f32
    %117 = vector.broadcast %cst_44 : f32 to vector<2x4xf32>
    %118 = vector.extract_strided_slice %39 {offsets = [0, 0], sizes = [2, 4], strides = [1, 1]} : vector<2x12xf32> to vector<2x4xf32>
    %119 = vector.extract_strided_slice %116 {offsets = [0, 0], sizes = [2, 1], strides = [1, 1]} : vector<2x3xf32> to vector<2x1xf32>
    %120 = vector.broadcast %119 : vector<2x1xf32> to vector<2x4xf32>
    %121 = arith.mulf %118, %120 : vector<2x4xf32>
    %122 = arith.addf %117, %121 : vector<2x4xf32>
    %123 = vector.extract_strided_slice %39 {offsets = [0, 4], sizes = [2, 4], strides = [1, 1]} : vector<2x12xf32> to vector<2x4xf32>
    %124 = vector.extract_strided_slice %116 {offsets = [0, 1], sizes = [2, 1], strides = [1, 1]} : vector<2x3xf32> to vector<2x1xf32>
    %125 = vector.broadcast %124 : vector<2x1xf32> to vector<2x4xf32>
    %126 = arith.mulf %123, %125 : vector<2x4xf32>
    %127 = arith.addf %122, %126 : vector<2x4xf32>
    %128 = vector.extract_strided_slice %39 {offsets = [0, 8], sizes = [2, 4], strides = [1, 1]} : vector<2x12xf32> to vector<2x4xf32>
    %129 = vector.extract_strided_slice %116 {offsets = [0, 2], sizes = [2, 1], strides = [1, 1]} : vector<2x3xf32> to vector<2x1xf32>
    %130 = vector.broadcast %129 : vector<2x1xf32> to vector<2x4xf32>
    %131 = arith.mulf %128, %130 : vector<2x4xf32>
    %132 = arith.addf %127, %131 : vector<2x4xf32>
    %c0_45 = arith.constant 0 : index
    %c0_46 = arith.constant 0 : index
    %133 = vector.load %arg5[%c0_45, %c0_46] : memref<2x19xf32, #tpu.memory_space<vmem>>, vector<2x12xf32>
    tpu.vector_store %arg5[%c0_45, %c0_46], %39 {strides = array<i32>} : memref<2x19xf32, #tpu.memory_space<vmem>>, vector<2x12xf32>,
    %c0_47 = arith.constant 0 : index
    %c12 = arith.constant 12 : index
    %134 = vector.load %arg5[%c0_47, %c12] : memref<2x19xf32, #tpu.memory_space<vmem>>, vector<2x3xf32>
    tpu.vector_store %arg5[%c0_47, %c12], %116 {strides = array<i32>} : memref<2x19xf32, #tpu.memory_space<vmem>>, vector<2x3xf32>,
    %c0_48 = arith.constant 0 : index
    %c15 = arith.constant 15 : index
    %135 = vector.load %arg5[%c0_48, %c15] : memref<2x19xf32, #tpu.memory_space<vmem>>, vector<2x4xf32>
    tpu.vector_store %arg5[%c0_48, %c15], %132 {strides = array<i32>} : memref<2x19xf32, #tpu.memory_space<vmem>>, vector<2x4xf32>,
    return
  }
}

</mosaic_0001>

<llo_original>
// kernel: tpu_custom_call.1
$region0: #{tpu_custom_call.1}
  #allocation0 [shape = 'u32[]', space=smem, size = 0x4, offset = 0x4, fixed_abs, tag = 'smem constant byte address 0x4 - core index']
  #allocation1 [shape = 'u32[72,128]{1,0:T(1,128)}', space=vmem, size = 0x9000, scoped, tag = 'internal scratch']
  %s0 = inlined_call_operand.vmem [shape: f32[32,8], index: 0, kind: input, shape index: {}]
  %s1 = inlined_call_operand.vmem [shape: f32[32,32], index: 1, kind: input, shape index: {}]
  %s2 = inlined_call_operand.vmem [shape: f32[2,32], index: 2, kind: input, shape index: {}]
  %s3 = inlined_call_operand.vmem [shape: f32[456,112], index: 3, kind: input, shape index: {}]
  %s4 = inlined_call_operand.vmem [shape: f32[5,112], index: 4, kind: input, shape index: {}]
  %s5 = inlined_call_operand.hbm [shape: f32[2,19], index: 5, kind: output, shape index: {}]
  %s6 = sld [smem:[#allocation0]]
  $region30: #{tpu_custom_call.1} parent=0
    _
  %s8 = ssub.s32 1, %s6
  %s9 = scalar_select 0, %s8, %s6
  $region1: #{tpu_custom_call.1} parent=0
    #allocation2 [shape = 'u8[1024]{0}', space=vmem, size = 0x400, scoped, tag = 'output window, operand 0, single buffered']
    #allocation3 [shape = 's32[1]{0}', space=sflag, size = 0x4, scoped, tag = 'scoped memory for tpu_custom_call.1']
    %10 = vsyncpa [#allocation3], 0
    // Predicated region
    $region2: #{tpu_custom_call.1} parent=1 // pred_check
      _
    $region3: #{tpu_custom_call.1} parent=1 // pred_check_branch
      %12 = sbr.rel (0) target = $region5
    $region4: #{tpu_custom_call.1} parent=1 // pred_region
      _
    $region5: #{tpu_custom_call.1} parent=1 // pred_fallthru
      _
    // Predicated region
    $region6: #{tpu_custom_call.1} parent=1 // pred_check
      _
    $region7: #{tpu_custom_call.1} parent=1 // pred_check_branch
      %14 = sbr.rel (0) target = $region9
    $region8: #{tpu_custom_call.1} parent=1 // pred_region
      _
    $region9: #{tpu_custom_call.1} parent=1 // pred_fallthru
      _
    // Predicated region
    $region10: #{tpu_custom_call.1} parent=1 // pred_check
      _
    $region11: #{tpu_custom_call.1} parent=1 // pred_check_branch
      %16 = sbr.rel (0) target = $region13
    $region12: #{tpu_custom_call.1} parent=1 // pred_region
      _
    $region13: #{tpu_custom_call.1} parent=1 // pred_fallthru
      _
    // Predicated region
    $region14: #{tpu_custom_call.1} parent=1 // pred_check
      _
    $region15: #{tpu_custom_call.1} parent=1 // pred_check_branch
      %18 = sbr.rel (0) target = $region17
    $region16: #{tpu_custom_call.1} parent=1 // pred_region
      _
    $region17: #{tpu_custom_call.1} parent=1 // pred_fallthru
      _
    // Predicated region
    $region18: #{tpu_custom_call.1} parent=1 // pred_check
      _
    $region19: #{tpu_custom_call.1} parent=1 // pred_check_branch
      %20 = sbr.rel (0) target = $region21
    $region20: #{tpu_custom_call.1} parent=1 // pred_region
      _
    $region21: #{tpu_custom_call.1} parent=1 // pred_fallthru
      _
    %v21 = vld [vmem:[%s0] sm:$0xff]
    %v22 = vld [vmem:[%s0 + $0x8] sm:$0xff]
    %v23 = vld [vmem:[%s0 + $0x10] sm:$0xff]
    %v24 = vld [vmem:[%s0 + $0x18] sm:$0xff]
    %v25 = vld [vmem:[%s1] sm:$0xff]
    %v26 = vld [vmem:[%s1 + $0x8] sm:$0xff]
    %v27 = vld [vmem:[%s1 + $0x10] sm:$0xff]
    %v28 = vld [vmem:[%s1 + $0x18] sm:$0xff]
    %vm29 = vcmask 261120
    %v31 = vsel %vm29, %v25, 0
    %v34 = vsel %vm29, %v26, 0
    %v37 = vsel %vm29, %v27, 0
    %v40 = vsel %vm29, %v28, 0
    %42 = vmatpush.msra.mxu0 0.0
    %43 = vmatpush.msra.mxu0 0.0
    %44 = vmatpush.msra.mxu0 0.0
    %45 = vmatpush.msra.mxu0 0.0
    %46 = vmatpush.msra.mxu0 0.0
    %47 = vmatpush.msra.mxu0 0.0
    %48 = vmatpush.msra.mxu0 0.0
    %49 = vmatpush.msra.mxu0 0.0
    %50 = vmatpush.msra.mxu0 0.0
    %51 = vmatpush.msra.mxu0 0.0
    %52 = vmatpush.msra.mxu0 0.0
    %53 = vmatpush.msra.mxu0 0.0
    %54 = vmatpush.msra.mxu0 %v24
    %55 = vmatpush.msra.mxu0 %v23
    %56 = vmatpush.msra.mxu0 %v22
    %57 = vmatpush.msra.mxu0 %v21
    %58 = vmatmul.f32.gmra.mxu0 %v31
    %v59 = vpop.f32.mrf.mxu0
    %v60 = vadd.f32 0.0, %v59
    %61 = vmatmul.f32.gmra.mxu0 %v34
    %v62 = vpop.f32.mrf.mxu0
    %v63 = vadd.f32 0.0, %v62
    %64 = vmatmul.f32.gmra.mxu0 %v37
    %v65 = vpop.f32.mrf.mxu0
    %v66 = vadd.f32 0.0, %v65
    %67 = vmatmul.f32.gmra.mxu0 %v40
    %v68 = vpop.f32.mrf.mxu0
    %v69 = vadd.f32 0.0, %v68
    %70 = vdwg.mxu0
    %v71 = vld [vmem:[%s3] sm:$0xff]
    %v72 = vld [vmem:[%s4] sm:$0x1]
    %v73 = vperm.slane %v72, 0
    %vm74 = vcmask 64512
    %v76 = vsel %vm74, %v60, 0
    %v79 = vsel %vm74, %v63, 0
    %v82 = vsel %vm74, %v66, 0
    %v85 = vsel %vm74, %v69, 0
    %87 = vmatpush.msra.mxu0 0.0
    %88 = vmatpush.msra.mxu0 0.0
    %89 = vmatpush.msra.mxu0 0.0
    %90 = vmatpush.msra.mxu0 0.0
    %91 = vmatpush.msra.mxu0 0.0
    %92 = vmatpush.msra.mxu0 0.0
    %93 = vmatpush.msra.mxu0 0.0
    %94 = vmatpush.msra.mxu0 0.0
    %95 = vmatpush.msra.mxu0 0.0
    %96 = vmatpush.msra.mxu0 0.0
    %97 = vmatpush.msra.mxu0 0.0
    %98 = vmatpush.msra.mxu0 0.0
    %99 = vmatpush.msra.mxu0 0.0
    %100 = vmatpush.msra.mxu0 0.0
    %101 = vmatpush.msra.mxu0 0.0
    %102 = vmatpush.msra.mxu0 %v71
    %103 = vmatmul.f32.gmra.mxu0 %v76
    %v104 = vpop.f32.mrf.mxu0
    %v105 = vadd.f32 %v73, %v104
    %106 = vmatmul.f32.gmra.mxu0 %v79
    %v107 = vpop.f32.mrf.mxu0
    %v108 = vadd.f32 %v73, %v107
    %109 = vmatmul.f32.gmra.mxu0 %v82
    %v110 = vpop.f32.mrf.mxu0
    %v111 = vadd.f32 %v73, %v110
    %112 = vmatmul.f32.gmra.mxu0 %v85
    %v113 = vpop.f32.mrf.mxu0
    %v114 = vadd.f32 %v73, %v113
    %115 = vdwg.mxu0
    %v116 = vmax.f32 %v105, 0.0
    %v117 = vmax.f32 %v108, 0.0
    %v118 = vmax.f32 %v111, 0.0
    %v119 = vmax.f32 %v114, 0.0
    %v120 = vld [vmem:[%s3 + $0x8] sm:$0xff]
    %v121 = vld [vmem:[%s3 + $0x10] sm:$0xff]
    %v122 = vld [vmem:[%s3 + $0x18] sm:$0xff]
    %v123 = vld [vmem:[%s3 + $0x20] sm:$0xff]
    %v124 = vld [vmem:[%s3 + $0x28] sm:$0xff]
    %v125 = vld [vmem:[%s3 + $0x30] sm:$0xff]
    %v126 = vld [vmem:[%s3 + $0x38] sm:$0xff]
    %v127 = vld [vmem:[%s3 + $0x40] sm:$0xff]
    %v128 = vld [vmem:[%s3 + $0x48] sm:$0xff]
    %v129 = vld [vmem:[%s3 + $0x50] sm:$0xff]
    %v130 = vld [vmem:[%s3 + $0x58] sm:$0xff]
    %v131 = vld [vmem:[%s3 + $0x60] sm:$0xff]
    %v132 = vld [vmem:[%s3 + $0x68] sm:$0xff]
    %v133 = vld [vmem:[%s3 + $0x70] sm:$0xff]
    %v134 = vld [vmem:[%s4 + $0x1] sm:$0x1]
    %v135 = vperm.slane %v134, 0
    %vm136 = vcmask 916480
    %v138 = vsel %vm136, %v116, 0
    %v141 = vsel %vm136, %v117, 0
    %v144 = vsel %vm136, %v118, 0
    %v147 = vsel %vm136, %v119, 0
    %149 = vmatpush.msra.mxu0 0.0
    %150 = vmatpush.msra.mxu0 0.0
    %151 = vmatpush.msra.mxu0 %v133
    %152 = vmatpush.msra.mxu0 %v132
    %153 = vmatpush.msra.mxu0 %v131
    %154 = vmatpush.msra.mxu0 %v130
    %155 = vmatpush.msra.mxu0 %v129
    %156 = vmatpush.msra.mxu0 %v128
    %157 = vmatpush.msra.mxu0 %v127
    %158 = vmatpush.msra.mxu0 %v126
    %159 = vmatpush.msra.mxu0 %v125
    %160 = vmatpush.msra.mxu0 %v124
    %161 = vmatpush.msra.mxu0 %v123
    %162 = vmatpush.msra.mxu0 %v122
    %163 = vmatpush.msra.mxu0 %v121
    %164 = vmatpush.msra.mxu0 %v120
    %165 = vmatmul.f32.gmra.mxu0 %v138
    %v166 = vpop.f32.mrf.mxu0
    %v167 = vadd.f32 %v135, %v166
    %168 = vmatmul.f32.gmra.mxu0 %v141
    %v169 = vpop.f32.mrf.mxu0
    %v170 = vadd.f32 %v135, %v169
    %171 = vmatmul.f32.gmra.mxu0 %v144
    %v172 = vpop.f32.mrf.mxu0
    %v173 = vadd.f32 %v135, %v172
    %174 = vmatmul.f32.gmra.mxu0 %v147
    %v175 = vpop.f32.mrf.mxu0
    %v176 = vadd.f32 %v135, %v175
    %177 = vdwg.mxu0
    %v178 = vmax.f32 %v167, 0.0
    %v179 = vmax.f32 %v170, 0.0
    %v180 = vmax.f32 %v173, 0.0
    %v181 = vmax.f32 %v176, 0.0
    %182 = vmatpush.msra.mxu0 0.0
    %183 = vmatpush.msra.mxu0 0.0
    %184 = vmatpush.msra.mxu0 0.0
    %185 = vmatpush.msra.mxu0 0.0
    %186 = vmatpush.msra.mxu0 0.0
    %187 = vmatpush.msra.mxu0 0.0
    %188 = vmatpush.msra.mxu0 0.0
    %189 = vmatpush.msra.mxu0 0.0
    %190 = vmatpush.msra.mxu0 0.0
    %191 = vmatpush.msra.mxu0 0.0
    %192 = vmatpush.msra.mxu0 0.0
    %193 = vmatpush.msra.mxu0 0.0
    %194 = vmatpush.msra.mxu0 %v181
    %195 = vmatpush.msra.mxu0 %v180
    %196 = vmatpush.msra.mxu0 %v179
    %197 = vmatpush.msra.mxu0 %v178
    %198 = vmatmul.f32.gmra.mxu0 %v31
    %v199 = vpop.f32.mrf.mxu0
    %v200 = vadd.f32 0.0, %v199
    %201 = vmatmul.f32.gmra.mxu0 %v34
    %v202 = vpop.f32.mrf.mxu0
    %v203 = vadd.f32 0.0, %v202
    %204 = vmatmul.f32.gmra.mxu0 %v37
    %v205 = vpop.f32.mrf.mxu0
    %v206 = vadd.f32 0.0, %v205
    %207 = vmatmul.f32.gmra.mxu0 %v40
    %v208 = vpop.f32.mrf.mxu0
    %v209 = vadd.f32 0.0, %v208
    %210 = vdwg.mxu0
    %v211 = vld [vmem:[%s3 + $0x78] sm:$0xff]
    %v212 = vld [vmem:[%s3 + $0x80] sm:$0xff]
    %v213 = vld [vmem:[%s3 + $0x88] sm:$0xff]
    %v214 = vld [vmem:[%s3 + $0x90] sm:$0xff]
    %v215 = vld [vmem:[%s3 + $0x98] sm:$0xff]
    %v216 = vld [vmem:[%s3 + $0xa0] sm:$0xff]
    %v217 = vld [vmem:[%s3 + $0xa8] sm:$0xff]
    %v218 = vld [vmem:[%s3 + $0xb0] sm:$0xff]
    %v219 = vld [vmem:[%s3 + $0xb8] sm:$0xff]
    %v220 = vld [vmem:[%s3 + $0xc0] sm:$0xff]
    %v221 = vld [vmem:[%s3 + $0xc8] sm:$0xff]
    %v222 = vld [vmem:[%s3 + $0xd0] sm:$0xff]
    %v223 = vld [vmem:[%s3 + $0xd8] sm:$0xff]
    %v224 = vld [vmem:[%s3 + $0xe0] sm:$0xff]
    %v225 = vld [vmem:[%s4 + $0x2] sm:$0x1]
    %v226 = vperm.slane %v225, 0
    %v228 = vsel %vm136, %v200, 0
    %v231 = vsel %vm136, %v203, 0
    %v234 = vsel %vm136, %v206, 0
    %v237 = vsel %vm136, %v209, 0
    %239 = vmatpush.msra.mxu0 0.0
    %240 = vmatpush.msra.mxu0 0.0
    %241 = vmatpush.msra.mxu0 %v224
    %242 = vmatpush.msra.mxu0 %v223
    %243 = vmatpush.msra.mxu0 %v222
    %244 = vmatpush.msra.mxu0 %v221
    %245 = vmatpush.msra.mxu0 %v220
    %246 = vmatpush.msra.mxu0 %v219
    %247 = vmatpush.msra.mxu0 %v218
    %248 = vmatpush.msra.mxu0 %v217
    %249 = vmatpush.msra.mxu0 %v216
    %250 = vmatpush.msra.mxu0 %v215
    %251 = vmatpush.msra.mxu0 %v214
    %252 = vmatpush.msra.mxu0 %v213
    %253 = vmatpush.msra.mxu0 %v212
    %254 = vmatpush.msra.mxu0 %v211
    %255 = vmatmul.f32.gmra.mxu0 %v228
    %v256 = vpop.f32.mrf.mxu0
    %v257 = vadd.f32 %v226, %v256
    %258 = vmatmul.f32.gmra.mxu0 %v231
    %v259 = vpop.f32.mrf.mxu0
    %v260 = vadd.f32 %v226, %v259
    %261 = vmatmul.f32.gmra.mxu0 %v234
    %v262 = vpop.f32.mrf.mxu0
    %v263 = vadd.f32 %v226, %v262
    %264 = vmatmul.f32.gmra.mxu0 %v237
    %v265 = vpop.f32.mrf.mxu0
    %v266 = vadd.f32 %v226, %v265
    %267 = vdwg.mxu0
    %v268 = vmax.f32 %v257, 0.0
    %v269 = vmax.f32 %v260, 0.0
    %v270 = vmax.f32 %v263, 0.0
    %v271 = vmax.f32 %v266, 0.0
    %v272 = vld [vmem:[%s3 + $0xe8] sm:$0xff]
    %v273 = vld [vmem:[%s3 + $0xf0] sm:$0xff]
    %v274 = vld [vmem:[%s3 + $0xf8] sm:$0xff]
    %v275 = vld [vmem:[%s3 + $0x100] sm:$0xff]
    %v276 = vld [vmem:[%s3 + $0x108] sm:$0xff]
    %v277 = vld [vmem:[%s3 + $0x110] sm:$0xff]
    %v278 = vld [vmem:[%s3 + $0x118] sm:$0xff]
    %v279 = vld [vmem:[%s3 + $0x120] sm:$0xff]
    %v280 = vld [vmem:[%s3 + $0x128] sm:$0xff]
    %v281 = vld [vmem:[%s3 + $0x130] sm:$0xff]
    %v282 = vld [vmem:[%s3 + $0x138] sm:$0xff]
    %v283 = vld [vmem:[%s3 + $0x140] sm:$0xff]
    %v284 = vld [vmem:[%s3 + $0x148] sm:$0xff]
    %v285 = vld [vmem:[%s3 + $0x150] sm:$0xff]
    %v286 = vld [vmem:[%s4 + $0x3] sm:$0x1]
    %v287 = vperm.slane %v286, 0
    %v289 = vsel %vm136, %v268, 0
    %v292 = vsel %vm136, %v269, 0
    %v295 = vsel %vm136, %v270, 0
    %v298 = vsel %vm136, %v271, 0
    %300 = vmatpush.msra.mxu0 0.0
    %301 = vmatpush.msra.mxu0 0.0
    %302 = vmatpush.msra.mxu0 %v285
    %303 = vmatpush.msra.mxu0 %v284
    %304 = vmatpush.msra.mxu0 %v283
    %305 = vmatpush.msra.mxu0 %v282
    %306 = vmatpush.msra.mxu0 %v281
    %307 = vmatpush.msra.mxu0 %v280
    %308 = vmatpush.msra.mxu0 %v279
    %309 = vmatpush.msra.mxu0 %v278
    %310 = vmatpush.msra.mxu0 %v277
    %311 = vmatpush.msra.mxu0 %v276
    %312 = vmatpush.msra.mxu0 %v275
    %313 = vmatpush.msra.mxu0 %v274
    %314 = vmatpush.msra.mxu0 %v273
    %315 = vmatpush.msra.mxu0 %v272
    %316 = vmatmul.f32.gmra.mxu0 %v289
    %v317 = vpop.f32.mrf.mxu0
    %v318 = vadd.f32 %v287, %v317
    %319 = vmatmul.f32.gmra.mxu0 %v292
    %v320 = vpop.f32.mrf.mxu0
    %v321 = vadd.f32 %v287, %v320
    %322 = vmatmul.f32.gmra.mxu0 %v295
    %v323 = vpop.f32.mrf.mxu0
    %v324 = vadd.f32 %v287, %v323
    %325 = vmatmul.f32.gmra.mxu0 %v298
    %v326 = vpop.f32.mrf.mxu0
    %v327 = vadd.f32 %v287, %v326
    %328 = vdwg.mxu0
    %v329 = vmax.f32 %v318, 0.0
    %v330 = vmax.f32 %v321, 0.0
    %v331 = vmax.f32 %v324, 0.0
    %v332 = vmax.f32 %v327, 0.0
    %v333 = vld [vmem:[%s2] sm:$0x3]
    %v335 = vsel %vm29, %v333, 0
    %337 = vmatpush.msra.mxu0 0.0
    %338 = vmatpush.msra.mxu0 0.0
    %339 = vmatpush.msra.mxu0 0.0
    %340 = vmatpush.msra.mxu0 0.0
    %341 = vmatpush.msra.mxu0 0.0
    %342 = vmatpush.msra.mxu0 0.0
    %343 = vmatpush.msra.mxu0 0.0
    %344 = vmatpush.msra.mxu0 0.0
    %345 = vmatpush.msra.mxu0 0.0
    %346 = vmatpush.msra.mxu0 0.0
    %347 = vmatpush.msra.mxu0 0.0
    %348 = vmatpush.msra.mxu0 0.0
    %349 = vmatpush.msra.mxu0 %v332
    %350 = vmatpush.msra.mxu0 %v331
    %351 = vmatpush.msra.mxu0 %v330
    %352 = vmatpush.msra.mxu0 %v329
    %353 = vmatmul.f32.gmra.mxu0 %v335
    %v354 = vpop.f32.mrf.mxu0
    %v355 = vadd.f32 0.0, %v354
    %356 = vdwg.mxu0
    %v357 = vld [vmem:[%s3 + $0x158] sm:$0xff]
    %v358 = vld [vmem:[%s3 + $0x160] sm:$0xff]
    %v359 = vld [vmem:[%s3 + $0x168] sm:$0xff]
    %v360 = vld [vmem:[%s3 + $0x170] sm:$0xff]
    %v361 = vld [vmem:[%s3 + $0x178] sm:$0xff]
    %v362 = vld [vmem:[%s3 + $0x180] sm:$0xff]
    %v363 = vld [vmem:[%s3 + $0x188] sm:$0xff]
    %v364 = vld [vmem:[%s3 + $0x190] sm:$0xff]
    %v365 = vld [vmem:[%s3 + $0x198] sm:$0xff]
    %v366 = vld [vmem:[%s3 + $0x1a0] sm:$0xff]
    %v367 = vld [vmem:[%s3 + $0x1a8] sm:$0xff]
    %v368 = vld [vmem:[%s3 + $0x1b0] sm:$0xff]
    %v369 = vld [vmem:[%s3 + $0x1b8] sm:$0xff]
    %v370 = vld [vmem:[%s3 + $0x1c0] sm:$0xff]
    %v371 = vld [vmem:[%s4 + $0x4] sm:$0x1]
    %v372 = vperm.slane %v371, 0
    %v374 = vsel %vm136, %v355, 0
    %376 = vmatpush.msra.mxu0 0.0
    %377 = vmatpush.msra.mxu0 0.0
    %378 = vmatpush.msra.mxu0 %v370
    %379 = vmatpush.msra.mxu0 %v369
    %380 = vmatpush.msra.mxu0 %v368
    %381 = vmatpush.msra.mxu0 %v367
    %382 = vmatpush.msra.mxu0 %v366
    %383 = vmatpush.msra.mxu0 %v365
    %384 = vmatpush.msra.mxu0 %v364
    %385 = vmatpush.msra.mxu0 %v363
    %386 = vmatpush.msra.mxu0 %v362
    %387 = vmatpush.msra.mxu0 %v361
    %388 = vmatpush.msra.mxu0 %v360
    %389 = vmatpush.msra.mxu0 %v359
    %390 = vmatpush.msra.mxu0 %v358
    %391 = vmatpush.msra.mxu0 %v357
    %392 = vmatmul.f32.gmra.mxu0 %v374
    %v393 = vpop.f32.mrf.mxu0
    %v394 = vadd.f32 %v372, %v393
    %395 = vdwg.mxu0
    %v396 = vmul.f32 %v394, 0.5
    %398 = vrot.lane.b32.xlu0 %v396, 127
    %v399 = vpop.permute.xlu0 %398
    %v401 = vmax.f32 %v396, %v399
    %402 = vrot.lane.b32.xlu0 %v396, 126
    %v403 = vpop.permute.xlu0 %402
    %v405 = vmax.f32 %v401, %v403
    %v406 = vmin.f32 %v396, %v399
    %v407 = vmin.f32 %v406, %v403
    %v408 = vadd.f32 %v396, %v399
    %v409 = vadd.f32 %v408, %v403
    %v410 = vsub.f32 %v409, %v405
    %v411 = vsub.f32 %v410, %v407
    %v412 = vsub.f32 %v405, %v405
    %v413 = vsub.f32 %v411, %v405
    %v414 = vsub.f32 %v407, %v405
    %v415 = vsub.f32 %v412, 1.0
    %v416 = vadd.f32 %v412, %v413
    %v417 = vmul.f32 %v416, 0.5
    %v418 = vmul.f32 %v412, %v412
    %v419 = vmul.f32 %v413, %v413
    %v420 = vadd.f32 %v418, %v419
    %v421 = vmul.f32 %v420, 0.5
    %v422 = vmul.f32 %v417, %v417
    %v423 = vsub.f32 %v421, %v422
    %v424 = vmul.f32 %v423, 2.0
    %v425 = vsub.f32 1.0, %v424
    %v426 = vmul.f32 %v425, 0.5
    %v427 = vmax.f32 %v426, 0.0
    %v428 = vrsqrt.pop %v427
    %v429 = vmul.f32 %v428, %v427
    %v430 = vmul.f32 %v429, %v428
    %v431 = vmul.f32 0.5, %v430
    %v432 = vsub.f32 1.5, %v431
    %v433 = vmul.f32 %v428, %v432
    %v434 = vmul.f32 %v427, %v433
    %vm435 = vcmp.eq.f32.partialorder %v427, inf
    %v436 = vsel %vm435, %v427, %v434
    %vm437 = vcmp.eq.f32.partialorder %v427, 0.0
    %v438 = vand.u32 %v427, 2147483648
    %v439 = vsel %vm437, %v438, %v436
    %v440 = vsub.f32 %v417, %v439
    %v441 = vadd.f32 %v416, %v414
    %v442 = vmul.f32 %v441, 0.33333334
    %v443 = vmul.f32 %v414, %v414
    %v444 = vadd.f32 %v420, %v443
    %v445 = vmul.f32 %v444, 0.33333334
    %v446 = vmul.f32 %v442, %v442
    %v447 = vsub.f32 %v445, %v446
    %v448 = vmul.f32 %v447, 3.0
    %v449 = vsub.f32 1.0, %v448
    %v450 = vmul.f32 %v449, 0.33333334
    %v451 = vmax.f32 %v450, 0.0
    %v452 = vrsqrt.pop %v451
    %v453 = vmul.f32 %v452, %v451
    %v454 = vmul.f32 %v453, %v452
    %v455 = vmul.f32 0.5, %v454
    %v456 = vsub.f32 1.5, %v455
    %v457 = vmul.f32 %v452, %v456
    %v458 = vmul.f32 %v451, %v457
    %vm459 = vcmp.eq.f32.partialorder %v451, inf
    %v460 = vsel %vm459, %v451, %v458
    %vm461 = vcmp.eq.f32.partialorder %v451, 0.0
    %v462 = vand.u32 %v451, 2147483648
    %v463 = vsel %vm461, %v462, %v460
    %v464 = vsub.f32 %v442, %v463
    %vm465 = vcmp.le.f32.partialorder %v464, %v414
    %vm466 = vcmp.le.f32.partialorder %v440, %v413
    %v467 = vsel %vm466, %v440, %v415
    %v468 = vsel %vm465, %v464, %v467
    %470 = vset.pattern.permute.xlu0 12
    %471 = vperm.xlu0 %470, %v405
    %v472 = vpop.permute.xlu0 %471
    %v474 = vsub.f32 %v396, %v472
    %476 = vset.pattern.permute.xlu0 12
    %477 = vperm.xlu0 %476, %v468
    %v478 = vpop.permute.xlu0 %477
    %v480 = vsub.f32 %v474, %v478
    %v481 = vmax.f32 %v480, 0.0
    %v482 = vmul.f32 %v481, %v481
    %484 = vrot.lane.b32.xlu0 %v482, 116
    %v485 = vpop.permute.xlu0 %484
    %vm487 = vcmask 17408
    %v488 = vsel %vm487, %v485, 0.0
    %489 = vadd.xlane.f32.xlu0 %v488
    %v490 = vpop.xlane.xlu0 %489
    %v491 = vrcp.pop %v490
    %v492 = vmul.f32 %v490, %v491
    %v493 = vsub.f32 1.0, %v492
    %v494 = vmul.f32 %v491, %v493
    %v495 = vadd.f32 %v491, %v494
    %vm496 = vweird.f32 %v490
    %vm497 = vweird.f32 %v491
    %vm498 = vmor %vm496, %vm497
    %v499 = vsel %vm498, %v491, %v495
    %v500 = vand.u32 2147483647, %v490
    %vm501 = vcmp.eq.f32.partialorder %v500, 8.507059e+37
    %v502 = vand.u32 %v490, 2147483648
    %v503 = vor.u32 1.1754944e-38, %v502
    %v504 = vsel %vm501, %v503, %v499
    %v505 = vmul.f32 %v482, %v504
    %507 = vset.pattern.permute.xlu0 12
    %508 = vperm.xlu0 %507, %v505
    %v509 = vpop.permute.xlu0 %508
    %v511 = vmul.f32 %v394, %v509
    %v512 = vadd.f32 %v511, 0.0
    %513 = vset.pattern.permute.xlu0 13
    %514 = vperm.xlu0 %513, %v505
    %v515 = vpop.permute.xlu0 %514
    %v517 = vmul.f32 %v394, %v515
    %519 = vrot.lane.b32.xlu0 %v517, 124
    %v520 = vpop.permute.xlu0 %519
    %v522 = vadd.f32 %v512, %v520
    %523 = vset.pattern.permute.xlu0 14
    %524 = vperm.xlu0 %523, %v505
    %v525 = vpop.permute.xlu0 %524
    %v527 = vmul.f32 %v394, %v525
    %529 = vrot.lane.b32.xlu0 %v527, 120
    %v530 = vpop.permute.xlu0 %529
    %v532 = vadd.f32 %v522, %v530
    %vm533 = vcmask 91136
    %534 = vst.msk [vmem:[#allocation2] sm:$0x3] %vm533, %v394
    %vm535 = vcmask 115808
    %536 = vst.msk [vmem:[#allocation2] sm:$0x3] %vm535, %v505
    %538 = vrot.lane.b32.xlu0 %v532, 15
    %v539 = vpop.permute.xlu0 %538
    %vm541 = vcmask 148600
    %542 = vst.msk [vmem:[#allocation2] sm:$0x3] %vm541, %v539
    // Predicated region
    $region22: #{tpu_custom_call.1} parent=1 // pred_check
      _
    $region23: #{tpu_custom_call.1} parent=1 // pred_check_branch
      %544 = sbr.rel (0) target = $region25
    $region24: #{tpu_custom_call.1} parent=1 // pred_region
      %546 = vsyncadd [#allocation3], 0
      %s548 = sshll.u32 [#allocation2], 4
      %s549 = int_to_ptr.vmem [resolvable:$true] %s548
      %s550 = sshll.u32 %s5, 4
      %s551 = int_to_ptr.hbm [resolvable:$true] %s550
      %553 = dma.vmem_to_hbm [thread:$0]  %s549, 32, %s551, [#allocation3]
    $region25: #{tpu_custom_call.1} parent=1 // pred_fallthru
      _
    // Predicated region
    $region26: #{tpu_custom_call.1} parent=1 // pred_check
      _
    $region27: #{tpu_custom_call.1} parent=1 // pred_check_branch
      %555 = sbr.rel (0) target = $region29
    $region28: #{tpu_custom_call.1} parent=1 // pred_region
      %557 = dma.done [#allocation3], 32
    $region29: #{tpu_custom_call.1} parent=1 // pred_fallthru
      _
    %558 = vsyncpa [#allocation3], 1

</llo_original>
